<compile_context>
chip_gen: v5e
topology: v5e:2x2
jax: 0.10.0
libtpu: 0.0.40
codegen_flags: <defaults>
</compile_context>

<pallas_src>
import jax
import jax.numpy as jnp
from jax.experimental import pallas as pl
from jax.experimental.pallas import tpu as pltpu


def _round_up(v: int, m: int) -> int:
    return ((v + m - 1) // m) * m


# ---------------------------------------------------------------------------
# Kernels
# ---------------------------------------------------------------------------

def _rb_proj_kernel(x_ref, w1ws_ref, b1_ref, w2_ref, b2s_ref, o_ref):
    """Projection-shortcut variant (input_dim != output_dim).

    x:    (TB, Din)        streamed activation (f32 or bf16)
    w1ws: (Din, 2*Dh)      [W1 | Ws] concatenated (Dh = Dout padded to 128 lanes)
    b1:   (1, Dh)          f32
    w2:   (Dh, Dh)
    b2s:  (1, Dh)          f32, = b2 + bs (folded at prep time)
    o:    (TB, Dout)       unpadded output
    """
    x = x_ref[...]
    xm = x if x.dtype == w1ws_ref.dtype else x.astype(w1ws_ref.dtype)
    dh = b1_ref.shape[-1]                       # lane-aligned split point of [W1 | Ws]
    # One MXU pass shared by linear1 and the shortcut projection.
    hs = jnp.dot(xm, w1ws_ref[...], preferred_element_type=jnp.float32)   # (TB, 2*Dh)
    h = jnp.tanh(hs[:, :dh] + b1_ref[...])
    s = hs[:, dh:]                                                         # shortcut, (TB, Dh)
    hm = h if h.dtype == w2_ref.dtype else h.astype(w2_ref.dtype)
    y = jnp.dot(hm, w2_ref[...], preferred_element_type=jnp.float32)      # (TB, Dh)
    res = jnp.tanh(y + b2s_ref[...] + s)
    do = o_ref.shape[-1]
    o_ref[...] = res[:, :do].astype(o_ref.dtype)


def _rb_id_kernel(x_ref, w1_ref, b1_ref, w2_ref, b2_ref, o_ref):
    """Identity-shortcut variant (input_dim == output_dim): no third matmul, no Ws DMA.

    x:  (TB, Dout)   streamed activation (also the residual)
    w1: (Dout, Dh)   (Dh = Dout padded to 128 lanes)
    b1: (1, Dh) f32
    w2: (Dh, Dh)
    b2: (1, Dout) f32 (unpadded)
    o:  (TB, Dout)
    """
    x = x_ref[...]
    x32 = x.astype(jnp.float32)                 # residual add in f32
    xm = x if x.dtype == w1_ref.dtype else x.astype(w1_ref.dtype)
    h = jnp.tanh(jnp.dot(xm, w1_ref[...], preferred_element_type=jnp.float32) + b1_ref[...])
    hm = h if h.dtype == w2_ref.dtype else h.astype(w2_ref.dtype)
    y = jnp.dot(hm, w2_ref[...], preferred_element_type=jnp.float32)      # (TB, Dh)
    do = o_ref.shape[-1]
    o_ref[...] = jnp.tanh(y[:, :do] + b2_ref[...] + x32).astype(o_ref.dtype)


# ---------------------------------------------------------------------------
# One-time parameter preparation (hoisted out of the forward call)
# ---------------------------------------------------------------------------

def prepare_params(w1, b1, w2, b2, ws=None, bs=None, *,
                   matmul_dtype=jnp.bfloat16, lane_multiple=128):
    """Pad the hidden dim to a lane multiple, fuse [W1 | Ws], fold bs into b2, cast weights.

    Raw weights are in (in, out) layout (transpose of PyTorch's nn.Linear (out, in)).
    Do this ONCE at parameter-setup time; the result is reused by every forward call.
    """
    assert lane_multiple % 128 == 0, "split of [W1 | Ws] must stay 128-lane aligned"
    din, dout = w1.shape
    has_proj = ws is not None
    if not has_proj:
        assert din == dout, "identity shortcut requires input_dim == output_dim"
    dh = _round_up(dout, lane_multiple)
    pad_d = dh - dout
    w_dtype = matmul_dtype if matmul_dtype is not None else w1.dtype

    def padc(a):   # pad trailing (output) columns to Dh
        return jnp.pad(a, ((0, 0), (0, pad_d))) if pad_d else a

    def padrc(a):  # pad rows and columns (hidden x hidden)
        return jnp.pad(a, ((0, pad_d), (0, pad_d))) if pad_d else a

    b1p = padc(b1.reshape(1, dout).astype(jnp.float32))
    w2p = padrc(w2).astype(w_dtype)

    if has_proj:
        w1ws = jnp.concatenate([padc(w1), padc(ws)], axis=1).astype(w_dtype)  # (Din, 2*Dh)
        b2sp = padc((b2 + bs).reshape(1, dout).astype(jnp.float32))
        return dict(kind="proj", din=din, dout=dout, dh=dh, ins=(w1ws, b1p, w2p, b2sp))

    w1p = padc(w1).astype(w_dtype)                                            # (Dout, Dh)
    b2u = b2.reshape(1, dout).astype(jnp.float32)
    return dict(kind="id", din=din, dout=dout, dh=dh, ins=(w1p, b1p, w2p, b2u))


# ---------------------------------------------------------------------------
# Forward wrapper
# ---------------------------------------------------------------------------

def residual_block_1d(x, params, *, block_b=1024, out_dtype=None):
    """Fused ResidualBlock1d forward.  x: (B, Din); returns (B, Dout) in x.dtype by default."""
    B, din = x.shape
    assert din == params["din"]
    dout, dh = params["dout"], params["dh"]
    out_dtype = x.dtype if out_dtype is None else out_dtype
    out_isize = jnp.dtype(out_dtype).itemsize

    # Batch tiling: multiple of 8 sublanes; capped so the grid has >= 2 "parallel" steps
    # whenever B allows (keeps both v7x TensorCores busy; harmless on v5e/v6e).
    tile_b = max(8, min(_round_up(block_b, 8), _round_up(pl.cdiv(B, 2), 8)))
    grid = (pl.cdiv(B, tile_b),)

    kernel = _rb_proj_kernel if params["kind"] == "proj" else _rb_id_kernel
    ins = (x,) + params["ins"]

    w_bytes = sum(int(a.size) * a.dtype.itemsize for a in params["ins"])
    if params["kind"] == "proj":
        flops = 2 * B * din * (2 * dh) + 2 * B * dh * dh
    else:
        flops = 2 * B * din * dh + 2 * B * dh * dh
    cost = pl.CostEstimate(
        flops=int(flops),
        transcendentals=int(2 * B * dh),
        bytes_accessed=int(B * din * x.dtype.itemsize + w_bytes + B * dout * out_isize),
    )

    def launch(single_buffer_weights):
        # Resident weights/biases never change block index; single-buffering them halves
        # their VMEM footprint (important on v7x's 64 MiB VMEM for large Dout).
        if single_buffer_weights:
            def const_spec(a):
                return pl.BlockSpec(a.shape, lambda i: (0, 0), pipeline_mode=pl.Buffered(1))
        else:
            def const_spec(a):
                return pl.BlockSpec(a.shape, lambda i: (0, 0))

        in_specs = [pl.BlockSpec((tile_b, din), lambda i: (i, 0))]          # x: streamed
        in_specs += [const_spec(a) for a in params["ins"]]                  # weights: resident

        wbuf = 1 if single_buffer_weights else 2
        vmem = (2 * tile_b * din * x.dtype.itemsize        # double-buffered x tiles
                + 2 * tile_b * dout * out_isize            # double-buffered out tiles
                + wbuf * w_bytes                           # resident weights/biases
                + 6 * tile_b * dh * 4                      # f32 intermediates (hs/h/y/res) slack
                + (4 << 20))                               # compiler scratch margin
        vmem = int(min(max(vmem, 16 << 20), 64 << 20))     # stay within v7x physical VMEM

        return pl.pallas_call(
            kernel,
            out_shape=jax.ShapeDtypeStruct((B, dout), out_dtype),
            grid=grid,
            in_specs=in_specs,
            out_specs=pl.BlockSpec((tile_b, dout), lambda i: (i, 0)),
            compiler_params=pltpu.CompilerParams(
                dimension_semantics=("parallel",),
                vmem_limit_bytes=vmem,
            ),
            cost_estimate=cost,
        )(*ins)

    try:
        return launch(True)
    except Exception:
        # pl.Buffered(1) not supported by this jax build -> default (double) weight buffering.
        return launch(False)


# ---------------------------------------------------------------------------
# Params / reference (matches ResidualBlock1d.init_params: glorot weights, zero bias)
# ---------------------------------------------------------------------------

def glorot_normal(key, fan_in, fan_out, dtype=jnp.float32):
    std = (2.0 / (fan_in + fan_out)) ** 0.5
    return std * jax.random.normal(key, (fan_in, fan_out), dtype=dtype)


def make_params(key, input_dim, output_dim, dtype=jnp.float32):
    """Raw weights in (in, out) layout (== transpose of PyTorch's (out, in))."""
    k1, k2, k3 = jax.random.split(key, 3)
    w1 = glorot_normal(k1, input_dim, output_dim, dtype)
    b1 = jnp.zeros((output_dim,), dtype)
    w2 = glorot_normal(k2, output_dim, output_dim, dtype)
    b2 = jnp.zeros((output_dim,), dtype)
    if input_dim != output_dim:
        ws = glorot_normal(k3, input_dim, output_dim, dtype)
        bs = jnp.zeros((output_dim,), dtype)
    else:
        ws, bs = None, None            # identity shortcut handled at trace time
    return w1, b1, w2, b2, ws, bs


def reference(x, w1, b1, w2, b2, ws=None, bs=None):
    h = jnp.tanh(x @ w1 + b1)
    y = h @ w2 + b2
    s = x if ws is None else x @ ws + bs
    return jnp.tanh(y + s)


if __name__ == "__main__":
    key = jax.random.PRNGKey(0)
    k_case1, k_case2 = jax.random.split(key)

    # Case 1: projection shortcut (input_dim != output_dim), f32 end-to-end, single tile.
    B1, din1, dout1 = 8, 16, 32
    kx1, kp1 = jax.random.split(k_case1)
    x1 = jax.random.normal(kx1, (B1, din1), dtype=jnp.float32)
    raw1 = make_params(kp1, din1, dout1)
    prep1_f32 = prepare_params(*raw1, matmul_dtype=jnp.float32)
    out1 = jax.block_until_ready(residual_block_1d(x1, prep1_f32))
    ref1 = reference(x1, *raw1)
    assert out1.shape == (B1, dout1)
    assert jnp.allclose(out1, ref1, atol=1e-5, rtol=1e-5)

    # Case 2: identity shortcut, ragged multi-tile batch (B=300, tile=128 -> grid=3), f32.
    B2, d2 = 300, 32
    kx2, kp2 = jax.random.split(k_case2)
    x2 = jax.random.normal(kx2, (B2, d2), dtype=jnp.float32)
    raw2 = make_params(kp2, d2, d2)
    prep2_f32 = prepare_params(*raw2, matmul_dtype=jnp.float32)
    out2 = jax.block_until_ready(residual_block_1d(x2, prep2_f32, block_b=128))
    ref2 = reference(x2, *raw2)
    assert out2.shape == (B2, d2)
    assert jnp.allclose(out2, ref2, atol=1e-5, rtol=1e-5)

    # Case 3: default bf16 weight storage, f32 activations streamed (in-kernel cast).
    prep2_bf16 = prepare_params(*raw2)
    out3 = jax.block_until_ready(residual_block_1d(x2, prep2_bf16, block_b=128))
    assert jnp.allclose(out3, ref2, atol=5e-2, rtol=0)

    # Case 4: bf16 end-to-end streaming (halves x/out HBM traffic, native-rate MXU).
    out4 = jax.block_until_ready(
        residual_block_1d(x2.astype(jnp.bfloat16), prep2_bf16, block_b=128))
    assert out4.dtype == jnp.bfloat16
    assert jnp.allclose(out4.astype(jnp.float32), ref2, atol=7e-2, rtol=0)

    # TODO(synk): fuse a stack of ResidualBlock1d layers into one pallas_call (loop over layers
    # in-kernel with all weights VMEM-resident) to amortize launch overhead at these widths.
    print("KERNEL_OK")
</pallas_src>

<mosaic_0001>
module attributes {stable_mosaic.version = 11 : i64} {
  func.func @_rb_proj_kernel(%arg0: i32, %arg1: memref<8x16xf32, #tpu.memory_space<vmem>>, %arg2: memref<16x256xf32, #tpu.memory_space<vmem>>, %arg3: memref<1x128xf32, #tpu.memory_space<vmem>>, %arg4: memref<128x128xf32, #tpu.memory_space<vmem>>, %arg5: memref<1x128xf32, #tpu.memory_space<vmem>>, %arg6: memref<8x32xf32, #tpu.memory_space<vmem>>) attributes {dimension_semantics = [#tpu.dimension_semantics<parallel>], iteration_bounds = array<i64: 1>, scalar_prefetch = 0 : i64, scratch_operands = 0 : i64, tpu.core_type = #tpu.core_type<tc>, window_params = [{transform_indices = @transform_0, window_bounds = array<i64: 8, 16>}, {pipeline_mode = #tpu.pipeline_mode<synchronous>, transform_indices = @transform_1, window_bounds = array<i64: 16, 256>}, {pipeline_mode = #tpu.pipeline_mode<synchronous>, transform_indices = @transform_2, window_bounds = array<i64: 1, 128>}, {pipeline_mode = #tpu.pipeline_mode<synchronous>, transform_indices = @transform_3, window_bounds = array<i64: 128, 128>}, {pipeline_mode = #tpu.pipeline_mode<synchronous>, transform_indices = @transform_4, window_bounds = array<i64: 1, 128>}, {transform_indices = @transform_5, window_bounds = array<i64: 8, 32>}]} {
    %c0 = arith.constant 0 : index
    %c0_0 = arith.constant 0 : index
    %0 = vector.load %arg1[%c0, %c0_0] : memref<8x16xf32, #tpu.memory_space<vmem>>, vector<8x16xf32>
    %c0_1 = arith.constant 0 : index
    %c0_2 = arith.constant 0 : index
    %1 = vector.load %arg2[%c0_1, %c0_2] : memref<16x256xf32, #tpu.memory_space<vmem>>, vector<16x256xf32>
    %cst = arith.constant dense<0.000000e+00> : vector<8x256xf32>
    %2 = tpu.matmul %0, %1, %cst {dimension_numbers = #tpu.dot_dimension_numbers<[1], [0], [0], [1], [0, 0, 1, 1], [], []>} : vector<8x16xf32>, vector<16x256xf32>, vector<8x256xf32> -> vector<8x256xf32>
    %3 = vector.extract_strided_slice %2 {offsets = [0, 0], sizes = [8, 128], strides = [1, 1]} : vector<8x256xf32> to vector<8x128xf32>
    %c0_3 = arith.constant 0 : index
    %c0_4 = arith.constant 0 : index
    %4 = vector.load %arg3[%c0_3, %c0_4] : memref<1x128xf32, #tpu.memory_space<vmem>>, vector<1x128xf32>
    %5 = vector.broadcast %4 : vector<1x128xf32> to vector<8x128xf32>
    %6 = arith.addf %3, %5 : vector<8x128xf32>
    %7 = math.tanh %6 : vector<8x128xf32>
    %8 = vector.extract_strided_slice %2 {offsets = [0, 128], sizes = [8, 128], strides = [1, 1]} : vector<8x256xf32> to vector<8x128xf32>
    %c0_5 = arith.constant 0 : index
    %c0_6 = arith.constant 0 : index
    %9 = vector.load %arg4[%c0_5, %c0_6] : memref<128x128xf32, #tpu.memory_space<vmem>>, vector<128x128xf32>
    %cst_7 = arith.constant dense<0.000000e+00> : vector<8x128xf32>
    %10 = tpu.matmul %7, %9, %cst_7 {dimension_numbers = #tpu.dot_dimension_numbers<[1], [0], [0], [1], [0, 0, 1, 1], [], []>} : vector<8x128xf32>, vector<128x128xf32>, vector<8x128xf32> -> vector<8x128xf32>
    %c0_8 = arith.constant 0 : index
    %c0_9 = arith.constant 0 : index
    %11 = vector.load %arg5[%c0_8, %c0_9] : memref<1x128xf32, #tpu.memory_space<vmem>>, vector<1x128xf32>
    %12 = vector.broadcast %11 : vector<1x128xf32> to vector<8x128xf32>
    %13 = arith.addf %10, %12 : vector<8x128xf32>
    %14 = arith.addf %13, %8 : vector<8x128xf32>
    %15 = math.tanh %14 : vector<8x128xf32>
    %16 = vector.extract_strided_slice %15 {offsets = [0, 0], sizes = [8, 32], strides = [1, 1]} : vector<8x128xf32> to vector<8x32xf32>
    %c0_10 = arith.constant 0 : index
    %c0_11 = arith.constant 0 : index
    %17 = vector.load %arg6[%c0_10, %c0_11] : memref<8x32xf32, #tpu.memory_space<vmem>>, vector<8x32xf32>
    tpu.vector_store %arg6[%c0_10, %c0_11], %16 {strides = array<i32>} : memref<8x32xf32, #tpu.memory_space<vmem>>, vector<8x32xf32>,
    return
  }
  func.func @transform_0(%arg0: i32) -> (i32, i32) {
    %c0_i32 = arith.constant 0 : i32
    %c0_i32_0 = arith.constant 0 : i32
    return %arg0, %c0_i32 : i32, i32
  }
  func.func @transform_1(%arg0: i32) -> (i32, i32) {
    %c0_i32 = arith.constant 0 : i32
    %c0_i32_0 = arith.constant 0 : i32
    %c0_i32_1 = arith.constant 0 : i32
    return %c0_i32, %c0_i32_0 : i32, i32
  }
  func.func @transform_2(%arg0: i32) -> (i32, i32) {
    %c0_i32 = arith.constant 0 : i32
    %c0_i32_0 = arith.constant 0 : i32
    %c0_i32_1 = arith.constant 0 : i32
    return %c0_i32, %c0_i32_0 : i32, i32
  }
  func.func @transform_3(%arg0: i32) -> (i32, i32) {
    %c0_i32 = arith.constant 0 : i32
    %c0_i32_0 = arith.constant 0 : i32
    %c0_i32_1 = arith.constant 0 : i32
    return %c0_i32, %c0_i32_0 : i32, i32
  }
  func.func @transform_4(%arg0: i32) -> (i32, i32) {
    %c0_i32 = arith.constant 0 : i32
    %c0_i32_0 = arith.constant 0 : i32
    %c0_i32_1 = arith.constant 0 : i32
    return %c0_i32, %c0_i32_0 : i32, i32
  }
  func.func @transform_5(%arg0: i32) -> (i32, i32) {
    %c0_i32 = arith.constant 0 : i32
    %c0_i32_0 = arith.constant 0 : i32
    return %arg0, %c0_i32 : i32, i32
  }
}

module attributes {stable_mosaic.version = 11 : i64} {
  func.func @_rb_proj_kernel(%arg0: i32, %arg1: memref<8x16xf32, #tpu.memory_space<vmem>>, %arg2: memref<16x256xf32, #tpu.memory_space<vmem>>, %arg3: memref<1x128xf32, #tpu.memory_space<vmem>>, %arg4: memref<128x128xf32, #tpu.memory_space<vmem>>, %arg5: memref<1x128xf32, #tpu.memory_space<vmem>>, %arg6: memref<8x32xf32, #tpu.memory_space<vmem>>) attributes {dimension_semantics = [#tpu.dimension_semantics<parallel>], iteration_bounds = array<i64: 1>, scalar_prefetch = 0 : i64, scratch_operands = 0 : i64, tpu.core_type = #tpu.core_type<tc>, window_params = [{transform_indices = @transform_0, window_bounds = array<i64: 8, 16>}, {pipeline_mode = #tpu.pipeline_mode<synchronous>, transform_indices = @transform_1, window_bounds = array<i64: 16, 256>}, {pipeline_mode = #tpu.pipeline_mode<synchronous>, transform_indices = @transform_2, window_bounds = array<i64: 1, 128>}, {pipeline_mode = #tpu.pipeline_mode<synchronous>, transform_indices = @transform_3, window_bounds = array<i64: 128, 128>}, {pipeline_mode = #tpu.pipeline_mode<synchronous>, transform_indices = @transform_4, window_bounds = array<i64: 1, 128>}, {transform_indices = @transform_5, window_bounds = array<i64: 8, 32>}]} {
    %c0 = arith.constant 0 : index
    %c0_0 = arith.constant 0 : index
    %0 = vector.load %arg1[%c0, %c0_0] : memref<8x16xf32, #tpu.memory_space<vmem>>, vector<8x16xf32>
    %c0_1 = arith.constant 0 : index
    %c0_2 = arith.constant 0 : index
    %1 = vector.load %arg2[%c0_1, %c0_2] : memref<16x256xf32, #tpu.memory_space<vmem>>, vector<16x256xf32>
    %cst = arith.constant dense<0.000000e+00> : vector<8x256xf32>
    %2 = tpu.matmul %0, %1, %cst {dimension_numbers = #tpu.dot_dimension_numbers<[1], [0], [0], [1], [0, 0, 1, 1], [], []>} : vector<8x16xf32>, vector<16x256xf32>, vector<8x256xf32> -> vector<8x256xf32>
    %3 = vector.extract_strided_slice %2 {offsets = [0, 0], sizes = [8, 128], strides = [1, 1]} : vector<8x256xf32> to vector<8x128xf32>
    %c0_3 = arith.constant 0 : index
    %c0_4 = arith.constant 0 : index
    %4 = vector.load %arg3[%c0_3, %c0_4] : memref<1x128xf32, #tpu.memory_space<vmem>>, vector<1x128xf32>
    %5 = vector.broadcast %4 : vector<1x128xf32> to vector<8x128xf32>
    %6 = arith.addf %3, %5 : vector<8x128xf32>
    %7 = math.tanh %6 : vector<8x128xf32>
    %8 = vector.extract_strided_slice %2 {offsets = [0, 128], sizes = [8, 128], strides = [1, 1]} : vector<8x256xf32> to vector<8x128xf32>
    %c0_5 = arith.constant 0 : index
    %c0_6 = arith.constant 0 : index
    %9 = vector.load %arg4[%c0_5, %c0_6] : memref<128x128xf32, #tpu.memory_space<vmem>>, vector<128x128xf32>
    %cst_7 = arith.constant dense<0.000000e+00> : vector<8x128xf32>
    %10 = tpu.matmul %7, %9, %cst_7 {dimension_numbers = #tpu.dot_dimension_numbers<[1], [0], [0], [1], [0, 0, 1, 1], [], []>} : vector<8x128xf32>, vector<128x128xf32>, vector<8x128xf32> -> vector<8x128xf32>
    %c0_8 = arith.constant 0 : index
    %c0_9 = arith.constant 0 : index
    %11 = vector.load %arg5[%c0_8, %c0_9] : memref<1x128xf32, #tpu.memory_space<vmem>>, vector<1x128xf32>
    %12 = vector.broadcast %11 : vector<1x128xf32> to vector<8x128xf32>
    %13 = arith.addf %10, %12 : vector<8x128xf32>
    %14 = arith.addf %13, %8 : vector<8x128xf32>
    %15 = math.tanh %14 : vector<8x128xf32>
    %16 = vector.extract_strided_slice %15 {offsets = [0, 0], sizes = [8, 32], strides = [1, 1]} : vector<8x128xf32> to vector<8x32xf32>
    %c0_10 = arith.constant 0 : index
    %c0_11 = arith.constant 0 : index
    %17 = vector.load %arg6[%c0_10, %c0_11] : memref<8x32xf32, #tpu.memory_space<vmem>>, vector<8x32xf32>
    tpu.vector_store %arg6[%c0_10, %c0_11], %16 {strides = array<i32>} : memref<8x32xf32, #tpu.memory_space<vmem>>, vector<8x32xf32>,
    return
  }
  func.func @transform_0(%arg0: i32) -> (i32, i32) {
    %c0_i32 = arith.constant 0 : i32
    %c0_i32_0 = arith.constant 0 : i32
    return %arg0, %c0_i32 : i32, i32
  }
  func.func @transform_1(%arg0: i32) -> (i32, i32) {
    %c0_i32 = arith.constant 0 : i32
    %c0_i32_0 = arith.constant 0 : i32
    %c0_i32_1 = arith.constant 0 : i32
    return %c0_i32, %c0_i32_0 : i32, i32
  }
  func.func @transform_2(%arg0: i32) -> (i32, i32) {
    %c0_i32 = arith.constant 0 : i32
    %c0_i32_0 = arith.constant 0 : i32
    %c0_i32_1 = arith.constant 0 : i32
    return %c0_i32, %c0_i32_0 : i32, i32
  }
  func.func @transform_3(%arg0: i32) -> (i32, i32) {
    %c0_i32 = arith.constant 0 : i32
    %c0_i32_0 = arith.constant 0 : i32
    %c0_i32_1 = arith.constant 0 : i32
    return %c0_i32, %c0_i32_0 : i32, i32
  }
  func.func @transform_4(%arg0: i32) -> (i32, i32) {
    %c0_i32 = arith.constant 0 : i32
    %c0_i32_0 = arith.constant 0 : i32
    %c0_i32_1 = arith.constant 0 : i32
    return %c0_i32, %c0_i32_0 : i32, i32
  }
  func.func @transform_5(%arg0: i32) -> (i32, i32) {
    %c0_i32 = arith.constant 0 : i32
    %c0_i32_0 = arith.constant 0 : i32
    return %arg0, %c0_i32 : i32, i32
  }
}

</mosaic_0001>

<llo_original>
// kernel: tpu_custom_call.1
$region0: #{tpu_custom_call.1}
  #allocation0 [shape = 'u32[]', space=smem, size = 0x4, offset = 0x4, fixed_abs, tag = 'smem constant byte address 0x4 - core index']
  #allocation1 [shape = 'u32[72,128]{1,0:T(1,128)}', space=vmem, size = 0x9000, scoped, tag = 'internal scratch']
  %s0 = inlined_call_operand.hbm [shape: f32[8,16], index: 0, kind: input, shape index: {}]
  %s1 = inlined_call_operand.hbm [shape: f32[16,256], index: 1, kind: input, shape index: {}]
  %s2 = inlined_call_operand.vmem [shape: f32[1,128], index: 2, kind: input, shape index: {}]
  %s3 = inlined_call_operand.hbm [shape: f32[128,128], index: 3, kind: input, shape index: {}]
  %s4 = inlined_call_operand.vmem [shape: f32[1,128], index: 4, kind: input, shape index: {}]
  %s5 = inlined_call_operand.hbm [shape: f32[8,32], index: 5, kind: output, shape index: {}]
  %s6 = sld [smem:[#allocation0]]
  $region42: #{tpu_custom_call.1} parent=0
    _
  %s8 = ssub.s32 1, %s6
  %s9 = scalar_select 0, %s8, %s6
  $region1: #{tpu_custom_call.1} parent=0
    #allocation2 [shape = 'u8[4096]{0}', space=vmem, size = 0x1000, scoped, tag = 'input window, operand 0, single buffered']
    #allocation3 [shape = 's32[1]{0}', space=sflag, size = 0x4, scoped, tag = 'scoped memory for tpu_custom_call.1']
    #allocation4 [shape = 's32[1]{0}', space=sflag, size = 0x4, scoped, tag = 'scoped memory for tpu_custom_call.1']
    #allocation5 [shape = 'u8[16384]{0}', space=vmem, size = 0x4000, scoped, tag = 'input window, operand 1, single buffered']
    #allocation6 [shape = 's32[1]{0}', space=sflag, size = 0x4, scoped, tag = 'scoped memory for tpu_custom_call.1']
    #allocation7 [shape = 'u8[65536]{0}', space=vmem, size = 0x10000, scoped, tag = 'input window, operand 3, single buffered']
    #allocation8 [shape = 'u8[4096]{0}', space=vmem, size = 0x1000, scoped, tag = 'output window, operand 0, single buffered']
    %10 = vsyncpa [#allocation3], 0
    %11 = vsyncpa [#allocation6], 0
    %12 = vsyncpa [#allocation4], 0
    // Predicated region
    $region2: #{tpu_custom_call.1} parent=1 // pred_check
      _
    $region3: #{tpu_custom_call.1} parent=1 // pred_check_branch
      %14 = sbr.rel (0) target = $region5
    $region4: #{tpu_custom_call.1} parent=1 // pred_region
      %16 = vsyncadd [#allocation3], 0
      %s18 = sshll.u32 %s0, 4
      %s19 = int_to_ptr.hbm [resolvable:$true] %s18
      %s20 = sshll.u32 [#allocation2], 4
      %s21 = int_to_ptr.vmem [resolvable:$true] %s20
      %23 = dma.hbm_to_vmem [thread:$0]  %s19, 128, %s21, [#allocation3]
    $region5: #{tpu_custom_call.1} parent=1 // pred_fallthru
      _
    // Predicated region
    $region6: #{tpu_custom_call.1} parent=1 // pred_check
      _
    $region7: #{tpu_custom_call.1} parent=1 // pred_check_branch
      %25 = sbr.rel (0) target = $region9
    $region8: #{tpu_custom_call.1} parent=1 // pred_region
      %27 = vsyncadd [#allocation6], 0
      %s28 = sshll.u32 %s1, 4
      %s29 = int_to_ptr.hbm [resolvable:$true] %s28
      %s30 = sshll.u32 [#allocation5], 4
      %s31 = int_to_ptr.vmem [resolvable:$true] %s30
      %36 = dma.hbm_to_vmem [thread:$0]  %s29, 512, %s31, [#allocation6], 256, 256, 16
    $region9: #{tpu_custom_call.1} parent=1 // pred_fallthru
      _
    // Predicated region
    $region10: #{tpu_custom_call.1} parent=1 // pred_check
      _
    $region11: #{tpu_custom_call.1} parent=1 // pred_check_branch
      %38 = sbr.rel (0) target = $region13
    $region12: #{tpu_custom_call.1} parent=1 // pred_region
      _
    $region13: #{tpu_custom_call.1} parent=1 // pred_fallthru
      _
    // Predicated region
    $region14: #{tpu_custom_call.1} parent=1 // pred_check
      _
    $region15: #{tpu_custom_call.1} parent=1 // pred_check_branch
      %40 = sbr.rel (0) target = $region17
    $region16: #{tpu_custom_call.1} parent=1 // pred_region
      %42 = vsyncadd [#allocation6], 0
      %s43 = sshll.u32 %s3, 4
      %s44 = int_to_ptr.hbm [resolvable:$true] %s43
      %s45 = sshll.u32 [#allocation7], 4
      %s46 = int_to_ptr.vmem [resolvable:$true] %s45
      %51 = dma.hbm_to_vmem [thread:$0]  %s44, 2048, %s46, [#allocation6], 128, 128, 8
    $region17: #{tpu_custom_call.1} parent=1 // pred_fallthru
      _
    // Predicated region
    $region18: #{tpu_custom_call.1} parent=1 // pred_check
      _
    $region19: #{tpu_custom_call.1} parent=1 // pred_check_branch
      %53 = sbr.rel (0) target = $region21
    $region20: #{tpu_custom_call.1} parent=1 // pred_region
      _
    $region21: #{tpu_custom_call.1} parent=1 // pred_fallthru
      _
    // Predicated region
    $region22: #{tpu_custom_call.1} parent=1 // pred_check
      _
    $region23: #{tpu_custom_call.1} parent=1 // pred_check_branch
      %55 = sbr.rel (0) target = $region25
    $region24: #{tpu_custom_call.1} parent=1 // pred_region
      %57 = dma.done [#allocation3], 128
    $region25: #{tpu_custom_call.1} parent=1 // pred_fallthru
      _
    // Predicated region
    $region26: #{tpu_custom_call.1} parent=1 // pred_check
      _
    $region27: #{tpu_custom_call.1} parent=1 // pred_check_branch
      %59 = sbr.rel (0) target = $region29
    $region28: #{tpu_custom_call.1} parent=1 // pred_region
      %61 = dma.done [#allocation6], 512
    $region29: #{tpu_custom_call.1} parent=1 // pred_fallthru
      _
    // Predicated region
    $region30: #{tpu_custom_call.1} parent=1 // pred_check
      _
    $region31: #{tpu_custom_call.1} parent=1 // pred_check_branch
      %63 = sbr.rel (0) target = $region33
    $region32: #{tpu_custom_call.1} parent=1 // pred_region
      %65 = dma.done [#allocation6], 2048
    $region33: #{tpu_custom_call.1} parent=1 // pred_fallthru
      _
    %v66 = vld [vmem:[#allocation2] sm:$0xff]
    %v67 = vld [vmem:[#allocation5] sm:$0xff]
    %v68 = vld [vmem:[#allocation5 + $0x8] sm:$0xff]
    %v69 = vld [vmem:[#allocation5 + $0x10] sm:$0xff]
    %v70 = vld [vmem:[#allocation5 + $0x18] sm:$0xff]
    %vm71 = vcmask 130048
    %v73 = vsel %vm71, %v66, 0
    %75 = vmatpush.msra.mxu0 0.0
    %76 = vmatpush.msra.mxu0 0.0
    %77 = vmatpush.msra.mxu0 0.0
    %78 = vmatpush.msra.mxu0 0.0
    %79 = vmatpush.msra.mxu0 0.0
    %80 = vmatpush.msra.mxu0 0.0
    %81 = vmatpush.msra.mxu0 0.0
    %82 = vmatpush.msra.mxu0 0.0
    %83 = vmatpush.msra.mxu0 0.0
    %84 = vmatpush.msra.mxu0 0.0
    %85 = vmatpush.msra.mxu0 0.0
    %86 = vmatpush.msra.mxu0 0.0
    %87 = vmatpush.msra.mxu0 0.0
    %88 = vmatpush.msra.mxu0 0.0
    %89 = vmatpush.msra.mxu0 %v69
    %90 = vmatpush.msra.mxu0 %v67
    %91 = vmatmul.f32.gmra.mxu0 %v73
    %v92 = vpop.f32.mrf.mxu0
    %v93 = vadd.f32 0.0, %v92
    %94 = vdwg.mxu0
    %95 = vmatpush.msra.mxu0 0.0
    %96 = vmatpush.msra.mxu0 0.0
    %97 = vmatpush.msra.mxu0 0.0
    %98 = vmatpush.msra.mxu0 0.0
    %99 = vmatpush.msra.mxu0 0.0
    %100 = vmatpush.msra.mxu0 0.0
    %101 = vmatpush.msra.mxu0 0.0
    %102 = vmatpush.msra.mxu0 0.0
    %103 = vmatpush.msra.mxu0 0.0
    %104 = vmatpush.msra.mxu0 0.0
    %105 = vmatpush.msra.mxu0 0.0
    %106 = vmatpush.msra.mxu0 0.0
    %107 = vmatpush.msra.mxu0 0.0
    %108 = vmatpush.msra.mxu0 0.0
    %109 = vmatpush.msra.mxu0 %v70
    %110 = vmatpush.msra.mxu0 %v68
    %111 = vmatmul.f32.gmra.mxu0 %v73
    %v112 = vpop.f32.mrf.mxu0
    %v113 = vadd.f32 0.0, %v112
    %114 = vdwg.mxu0
    %v115 = vld [vmem:[%s2] sm:$0x1]
    %v117 = vperm.slane %v115, 0
    %v119 = vadd.f32 %v93, %v117
    %v120 = vtanh.pop %v119
    %v121 = vld [vmem:[#allocation7] sm:$0xff]
    %v122 = vld [vmem:[#allocation7 + $0x8] sm:$0xff]
    %v123 = vld [vmem:[#allocation7 + $0x10] sm:$0xff]
    %v124 = vld [vmem:[#allocation7 + $0x18] sm:$0xff]
    %v125 = vld [vmem:[#allocation7 + $0x20] sm:$0xff]
    %v126 = vld [vmem:[#allocation7 + $0x28] sm:$0xff]
    %v127 = vld [vmem:[#allocation7 + $0x30] sm:$0xff]
    %v128 = vld [vmem:[#allocation7 + $0x38] sm:$0xff]
    %v129 = vld [vmem:[#allocation7 + $0x40] sm:$0xff]
    %v130 = vld [vmem:[#allocation7 + $0x48] sm:$0xff]
    %v131 = vld [vmem:[#allocation7 + $0x50] sm:$0xff]
    %v132 = vld [vmem:[#allocation7 + $0x58] sm:$0xff]
    %v133 = vld [vmem:[#allocation7 + $0x60] sm:$0xff]
    %v134 = vld [vmem:[#allocation7 + $0x68] sm:$0xff]
    %v135 = vld [vmem:[#allocation7 + $0x70] sm:$0xff]
    %v136 = vld [vmem:[#allocation7 + $0x78] sm:$0xff]
    %v137 = vld [vmem:[%s4] sm:$0x1]
    %v139 = vperm.slane %v137, 0
    %141 = vmatpush.msra.mxu0 %v136
    %142 = vmatpush.msra.mxu0 %v135
    %143 = vmatpush.msra.mxu0 %v134
    %144 = vmatpush.msra.mxu0 %v133
    %145 = vmatpush.msra.mxu0 %v132
    %146 = vmatpush.msra.mxu0 %v131
    %147 = vmatpush.msra.mxu0 %v130
    %148 = vmatpush.msra.mxu0 %v129
    %149 = vmatpush.msra.mxu0 %v128
    %150 = vmatpush.msra.mxu0 %v127
    %151 = vmatpush.msra.mxu0 %v126
    %152 = vmatpush.msra.mxu0 %v125
    %153 = vmatpush.msra.mxu0 %v124
    %154 = vmatpush.msra.mxu0 %v123
    %155 = vmatpush.msra.mxu0 %v122
    %156 = vmatpush.msra.mxu0 %v121
    %157 = vmatmul.f32.gmra.mxu0 %v120
    %v158 = vpop.f32.mrf.mxu0
    %v159 = vadd.f32 %v139, %v158
    %160 = vdwg.mxu0
    %v161 = vadd.f32 %v159, %v113
    %v162 = vtanh.pop %v161
    %vm163 = vcmask 261120
    %164 = vst.msk [vmem:[#allocation8] sm:$0xff] %vm163, %v162
    // Predicated region
    $region34: #{tpu_custom_call.1} parent=1 // pred_check
      _
    $region35: #{tpu_custom_call.1} parent=1 // pred_check_branch
      %166 = sbr.rel (0) target = $region37
    $region36: #{tpu_custom_call.1} parent=1 // pred_region
      %168 = vsyncadd [#allocation4], 0
      %s170 = sshll.u32 [#allocation8], 4
      %s171 = int_to_ptr.vmem [resolvable:$true] %s170
      %s172 = sshll.u32 %s5, 4
      %s173 = int_to_ptr.hbm [resolvable:$true] %s172
      %175 = dma.vmem_to_hbm [thread:$0]  %s171, 128, %s173, [#allocation4]
    $region37: #{tpu_custom_call.1} parent=1 // pred_fallthru
      _
    // Predicated region
    $region38: #{tpu_custom_call.1} parent=1 // pred_check
      _
    $region39: #{tpu_custom_call.1} parent=1 // pred_check_branch
      %177 = sbr.rel (0) target = $region41
    $region40: #{tpu_custom_call.1} parent=1 // pred_region
      %179 = dma.done [#allocation4], 128
    $region41: #{tpu_custom_call.1} parent=1 // pred_fallthru
      _
    %180 = vsyncpa [#allocation3], 1
    %181 = vsyncpa [#allocation6], 1
    %182 = vsyncpa [#allocation4], 1

// kernel: tpu_custom_call.1
$region0: #{tpu_custom_call.1}
  #allocation0 [shape = 'u32[]', space=smem, size = 0x4, offset = 0x4, fixed_abs, tag = 'smem constant byte address 0x4 - core index']
  #allocation1 [shape = 'u32[72,128]{1,0:T(1,128)}', space=vmem, size = 0x9000, scoped, tag = 'internal scratch']
  %s0 = inlined_call_operand.hbm [shape: f32[8,16], index: 0, kind: input, shape index: {}]
  %s1 = inlined_call_operand.hbm [shape: f32[16,256], index: 1, kind: input, shape index: {}]
  %s2 = inlined_call_operand.vmem [shape: f32[1,128], index: 2, kind: input, shape index: {}]
  %s3 = inlined_call_operand.hbm [shape: f32[128,128], index: 3, kind: input, shape index: {}]
  %s4 = inlined_call_operand.vmem [shape: f32[1,128], index: 4, kind: input, shape index: {}]
  %s5 = inlined_call_operand.hbm [shape: f32[8,32], index: 5, kind: output, shape index: {}]
  %s6 = sld [smem:[#allocation0]]
  $region42: #{tpu_custom_call.1} parent=0
    _
  %s8 = ssub.s32 1, %s6
  %s9 = scalar_select 0, %s8, %s6
  $region1: #{tpu_custom_call.1} parent=0
    #allocation2 [shape = 'u8[4096]{0}', space=vmem, size = 0x1000, scoped, tag = 'input window, operand 0, single buffered']
    #allocation3 [shape = 's32[1]{0}', space=sflag, size = 0x4, scoped, tag = 'scoped memory for tpu_custom_call.1']
    #allocation4 [shape = 's32[1]{0}', space=sflag, size = 0x4, scoped, tag = 'scoped memory for tpu_custom_call.1']
    #allocation5 [shape = 'u8[16384]{0}', space=vmem, size = 0x4000, scoped, tag = 'input window, operand 1, single buffered']
    #allocation6 [shape = 's32[1]{0}', space=sflag, size = 0x4, scoped, tag = 'scoped memory for tpu_custom_call.1']
    #allocation7 [shape = 'u8[65536]{0}', space=vmem, size = 0x10000, scoped, tag = 'input window, operand 3, single buffered']
    #allocation8 [shape = 'u8[4096]{0}', space=vmem, size = 0x1000, scoped, tag = 'output window, operand 0, single buffered']
    %10 = vsyncpa [#allocation3], 0
    %11 = vsyncpa [#allocation6], 0
    %12 = vsyncpa [#allocation4], 0
    // Predicated region
    $region2: #{tpu_custom_call.1} parent=1 // pred_check
      _
    $region3: #{tpu_custom_call.1} parent=1 // pred_check_branch
      %14 = sbr.rel (0) target = $region5
    $region4: #{tpu_custom_call.1} parent=1 // pred_region
      %16 = vsyncadd [#allocation3], 0
      %s18 = sshll.u32 %s0, 4
      %s19 = int_to_ptr.hbm [resolvable:$true] %s18
      %s20 = sshll.u32 [#allocation2], 4
      %s21 = int_to_ptr.vmem [resolvable:$true] %s20
      %23 = dma.hbm_to_vmem [thread:$0]  %s19, 128, %s21, [#allocation3]
    $region5: #{tpu_custom_call.1} parent=1 // pred_fallthru
      _
    // Predicated region
    $region6: #{tpu_custom_call.1} parent=1 // pred_check
      _
    $region7: #{tpu_custom_call.1} parent=1 // pred_check_branch
      %25 = sbr.rel (0) target = $region9
    $region8: #{tpu_custom_call.1} parent=1 // pred_region
      %27 = vsyncadd [#allocation6], 0
      %s28 = sshll.u32 %s1, 4
      %s29 = int_to_ptr.hbm [resolvable:$true] %s28
      %s30 = sshll.u32 [#allocation5], 4
      %s31 = int_to_ptr.vmem [resolvable:$true] %s30
      %36 = dma.hbm_to_vmem [thread:$0]  %s29, 512, %s31, [#allocation6], 256, 256, 16
    $region9: #{tpu_custom_call.1} parent=1 // pred_fallthru
      _
    // Predicated region
    $region10: #{tpu_custom_call.1} parent=1 // pred_check
      _
    $region11: #{tpu_custom_call.1} parent=1 // pred_check_branch
      %38 = sbr.rel (0) target = $region13
    $region12: #{tpu_custom_call.1} parent=1 // pred_region
      _
    $region13: #{tpu_custom_call.1} parent=1 // pred_fallthru
      _
    // Predicated region
    $region14: #{tpu_custom_call.1} parent=1 // pred_check
      _
    $region15: #{tpu_custom_call.1} parent=1 // pred_check_branch
      %40 = sbr.rel (0) target = $region17
    $region16: #{tpu_custom_call.1} parent=1 // pred_region
      %42 = vsyncadd [#allocation6], 0
      %s43 = sshll.u32 %s3, 4
      %s44 = int_to_ptr.hbm [resolvable:$true] %s43
      %s45 = sshll.u32 [#allocation7], 4
      %s46 = int_to_ptr.vmem [resolvable:$true] %s45
      %51 = dma.hbm_to_vmem [thread:$0]  %s44, 2048, %s46, [#allocation6], 128, 128, 8
    $region17: #{tpu_custom_call.1} parent=1 // pred_fallthru
      _
    // Predicated region
    $region18: #{tpu_custom_call.1} parent=1 // pred_check
      _
    $region19: #{tpu_custom_call.1} parent=1 // pred_check_branch
      %53 = sbr.rel (0) target = $region21
    $region20: #{tpu_custom_call.1} parent=1 // pred_region
      _
    $region21: #{tpu_custom_call.1} parent=1 // pred_fallthru
      _
    // Predicated region
    $region22: #{tpu_custom_call.1} parent=1 // pred_check
      _
    $region23: #{tpu_custom_call.1} parent=1 // pred_check_branch
      %55 = sbr.rel (0) target = $region25
    $region24: #{tpu_custom_call.1} parent=1 // pred_region
      %57 = dma.done [#allocation3], 128
    $region25: #{tpu_custom_call.1} parent=1 // pred_fallthru
      _
    // Predicated region
    $region26: #{tpu_custom_call.1} parent=1 // pred_check
      _
    $region27: #{tpu_custom_call.1} parent=1 // pred_check_branch
      %59 = sbr.rel (0) target = $region29
    $region28: #{tpu_custom_call.1} parent=1 // pred_region
      %61 = dma.done [#allocation6], 512
    $region29: #{tpu_custom_call.1} parent=1 // pred_fallthru
      _
    // Predicated region
    $region30: #{tpu_custom_call.1} parent=1 // pred_check
      _
    $region31: #{tpu_custom_call.1} parent=1 // pred_check_branch
      %63 = sbr.rel (0) target = $region33
    $region32: #{tpu_custom_call.1} parent=1 // pred_region
      %65 = dma.done [#allocation6], 2048
    $region33: #{tpu_custom_call.1} parent=1 // pred_fallthru
      _
    %v66 = vld [vmem:[#allocation2] sm:$0xff]
    %v67 = vld [vmem:[#allocation5] sm:$0xff]
    %v68 = vld [vmem:[#allocation5 + $0x8] sm:$0xff]
    %v69 = vld [vmem:[#allocation5 + $0x10] sm:$0xff]
    %v70 = vld [vmem:[#allocation5 + $0x18] sm:$0xff]
    %vm71 = vcmask 130048
    %v73 = vsel %vm71, %v66, 0
    %75 = vmatpush.msra.mxu0 0.0
    %76 = vmatpush.msra.mxu0 0.0
    %77 = vmatpush.msra.mxu0 0.0
    %78 = vmatpush.msra.mxu0 0.0
    %79 = vmatpush.msra.mxu0 0.0
    %80 = vmatpush.msra.mxu0 0.0
    %81 = vmatpush.msra.mxu0 0.0
    %82 = vmatpush.msra.mxu0 0.0
    %83 = vmatpush.msra.mxu0 0.0
    %84 = vmatpush.msra.mxu0 0.0
    %85 = vmatpush.msra.mxu0 0.0
    %86 = vmatpush.msra.mxu0 0.0
    %87 = vmatpush.msra.mxu0 0.0
    %88 = vmatpush.msra.mxu0 0.0
    %89 = vmatpush.msra.mxu0 %v69
    %90 = vmatpush.msra.mxu0 %v67
    %91 = vmatmul.f32.gmra.mxu0 %v73
    %v92 = vpop.f32.mrf.mxu0
    %v93 = vadd.f32 0.0, %v92
    %94 = vdwg.mxu0
    %95 = vmatpush.msra.mxu0 0.0
    %96 = vmatpush.msra.mxu0 0.0
    %97 = vmatpush.msra.mxu0 0.0
    %98 = vmatpush.msra.mxu0 0.0
    %99 = vmatpush.msra.mxu0 0.0
    %100 = vmatpush.msra.mxu0 0.0
    %101 = vmatpush.msra.mxu0 0.0
    %102 = vmatpush.msra.mxu0 0.0
    %103 = vmatpush.msra.mxu0 0.0
    %104 = vmatpush.msra.mxu0 0.0
    %105 = vmatpush.msra.mxu0 0.0
    %106 = vmatpush.msra.mxu0 0.0
    %107 = vmatpush.msra.mxu0 0.0
    %108 = vmatpush.msra.mxu0 0.0
    %109 = vmatpush.msra.mxu0 %v70
    %110 = vmatpush.msra.mxu0 %v68
    %111 = vmatmul.f32.gmra.mxu0 %v73
    %v112 = vpop.f32.mrf.mxu0
    %v113 = vadd.f32 0.0, %v112
    %114 = vdwg.mxu0
    %v115 = vld [vmem:[%s2] sm:$0x1]
    %v117 = vperm.slane %v115, 0
    %v119 = vadd.f32 %v93, %v117
    %v120 = vtanh.pop %v119
    %v121 = vld [vmem:[#allocation7] sm:$0xff]
    %v122 = vld [vmem:[#allocation7 + $0x8] sm:$0xff]
    %v123 = vld [vmem:[#allocation7 + $0x10] sm:$0xff]
    %v124 = vld [vmem:[#allocation7 + $0x18] sm:$0xff]
    %v125 = vld [vmem:[#allocation7 + $0x20] sm:$0xff]
    %v126 = vld [vmem:[#allocation7 + $0x28] sm:$0xff]
    %v127 = vld [vmem:[#allocation7 + $0x30] sm:$0xff]
    %v128 = vld [vmem:[#allocation7 + $0x38] sm:$0xff]
    %v129 = vld [vmem:[#allocation7 + $0x40] sm:$0xff]
    %v130 = vld [vmem:[#allocation7 + $0x48] sm:$0xff]
    %v131 = vld [vmem:[#allocation7 + $0x50] sm:$0xff]
    %v132 = vld [vmem:[#allocation7 + $0x58] sm:$0xff]
    %v133 = vld [vmem:[#allocation7 + $0x60] sm:$0xff]
    %v134 = vld [vmem:[#allocation7 + $0x68] sm:$0xff]
    %v135 = vld [vmem:[#allocation7 + $0x70] sm:$0xff]
    %v136 = vld [vmem:[#allocation7 + $0x78] sm:$0xff]
    %v137 = vld [vmem:[%s4] sm:$0x1]
    %v139 = vperm.slane %v137, 0
    %141 = vmatpush.msra.mxu0 %v136
    %142 = vmatpush.msra.mxu0 %v135
    %143 = vmatpush.msra.mxu0 %v134
    %144 = vmatpush.msra.mxu0 %v133
    %145 = vmatpush.msra.mxu0 %v132
    %146 = vmatpush.msra.mxu0 %v131
    %147 = vmatpush.msra.mxu0 %v130
    %148 = vmatpush.msra.mxu0 %v129
    %149 = vmatpush.msra.mxu0 %v128
    %150 = vmatpush.msra.mxu0 %v127
    %151 = vmatpush.msra.mxu0 %v126
    %152 = vmatpush.msra.mxu0 %v125
    %153 = vmatpush.msra.mxu0 %v124
    %154 = vmatpush.msra.mxu0 %v123
    %155 = vmatpush.msra.mxu0 %v122
    %156 = vmatpush.msra.mxu0 %v121
    %157 = vmatmul.f32.gmra.mxu0 %v120
    %v158 = vpop.f32.mrf.mxu0
    %v159 = vadd.f32 %v139, %v158
    %160 = vdwg.mxu0
    %v161 = vadd.f32 %v159, %v113
    %v162 = vtanh.pop %v161
    %vm163 = vcmask 261120
    %164 = vst.msk [vmem:[#allocation8] sm:$0xff] %vm163, %v162
    // Predicated region
    $region34: #{tpu_custom_call.1} parent=1 // pred_check
      _
    $region35: #{tpu_custom_call.1} parent=1 // pred_check_branch
      %166 = sbr.rel (0) target = $region37
    $region36: #{tpu_custom_call.1} parent=1 // pred_region
      %168 = vsyncadd [#allocation4], 0
      %s170 = sshll.u32 [#allocation8], 4
      %s171 = int_to_ptr.vmem [resolvable:$true] %s170
      %s172 = sshll.u32 %s5, 4
      %s173 = int_to_ptr.hbm [resolvable:$true] %s172
      %175 = dma.vmem_to_hbm [thread:$0]  %s171, 128, %s173, [#allocation4]
    $region37: #{tpu_custom_call.1} parent=1 // pred_fallthru
      _
    // Predicated region
    $region38: #{tpu_custom_call.1} parent=1 // pred_check
      _
    $region39: #{tpu_custom_call.1} parent=1 // pred_check_branch
      %177 = sbr.rel (0) target = $region41
    $region40: #{tpu_custom_call.1} parent=1 // pred_region
      %179 = dma.done [#allocation4], 128
    $region41: #{tpu_custom_call.1} parent=1 // pred_fallthru
      _
    %180 = vsyncpa [#allocation3], 1
    %181 = vsyncpa [#allocation6], 1
    %182 = vsyncpa [#allocation4], 1

</llo_original>
